<compile_context>
chip_gen: v5e
topology: v5e:2x2
jax: 0.10.0
libtpu: 0.0.40
codegen_flags: <defaults>
</compile_context>

<pallas_src>
import math
import jax
import jax.numpy as jnp
from jax.experimental import pallas as pl
from jax.experimental.pallas import tpu as pltpu


def _round_up(n, m):
    return ((n + m - 1) // m) * m


def _choose_batch_tiling(batch, cap=2048, split_threshold=128):
    """Pick (tile_b, Bp, n_tiles).

    * tiles capped at `cap` rows (keeps double-buffered VMEM small on v5e),
    * at least 2 grid steps once batch >= split_threshold so the 'parallel'
      batch axis can shard across v7x's two TensorCores,
    * per-tile size (not the whole batch) is rounded to 16 rows, so padded-row
      overshoot is bounded by ~16*n_tiles instead of a whole tile.
    """
    n_tiles = max(1, -(-batch // cap))          # ceil(batch / cap)
    if batch >= split_threshold:
        n_tiles = max(n_tiles, 2)
    tile_b = max(16, _round_up(-(-batch // n_tiles), 16))
    return tile_b, tile_b * n_tiles, n_tiles


# ----------------------------- Pallas kernel -------------------------------
def iaf_made_kernel(x_ref, w1_ref, b1_ref, w2_ref, b2_ref, w3_ref, b3_ref,
                    out_ref):
    D = x_ref.shape[-1]                       # true feature width (static)
    Dp = out_ref.shape[-1]                    # 128-lane output slab width
    x = x_ref[...]                            # (tile_b, D) f32

    # MADE hidden layer 1 (mask folded into w1). f32 MXU: K = D is tiny and
    # this keeps the x-dependent path in full precision.
    h1 = jnp.dot(x, w1_ref[...], preferred_element_type=jnp.float32) + b1_ref[...]
    h1 = jnp.maximum(h1, 0.0)

    # MADE hidden layer 2: bf16 MXU, f32 accumulation.
    h2 = jnp.dot(h1.astype(jnp.bfloat16), w2_ref[...],
                 preferred_element_type=jnp.float32) + b2_ref[...]
    h2 = jnp.maximum(h2, 0.0)

    # Fused output head, packed into one 128-lane slab:
    #   cols [0:D)  -> m,  cols [D:2D) -> s,  cols [2D:Dp) -> exact zeros.
    out3 = jnp.dot(h2.astype(jnp.bfloat16), w3_ref[...],
                   preferred_element_type=jnp.float32) + b3_ref[...]

    # Align s with x's lanes [0:D) via a lane rotate (XLU slot, cheap), then do
    # the IAF regular update z = m + exp(-s) * x in f32 on the narrow lanes.
    s_at0 = pltpu.roll(out3, shift=Dp - D, axis=1)       # lanes [0:D) hold s
    z = out3[:, :D] + jnp.exp(-s_at0[:, :D]) * x         # (tile_b, D)

    # Single lane-dense unmasked store of the slab (s already sits in [D:2D)),
    # then overwrite the m lanes with z (small masked store).
    out_ref[...] = out3
    out_ref[:, :D] = z


# ----------------------------- wrapper --------------------------------------
def inverse_autoregressive_forward(x, packed):
    """Returns (z * scale, s - log(scale)) with scale = 1.0."""
    B, D = x.shape
    Hp = packed["w2"].shape[0]
    Dp_out = packed["w3"].shape[1]
    assert packed["w1"].shape == (D, Hp)
    assert 2 * D <= Dp_out

    tile_b, Bp, n_tiles = _choose_batch_tiling(B)
    grid = (n_tiles,)

    x_in = x.astype(jnp.float32)
    if Bp != B:
        # Only the batch dim is padded (features stay at width D).
        x_in = jnp.zeros((Bp, D), jnp.float32).at[:B].set(x_in)

    def const_spec(shape):
        # Grid-invariant weight block (same block every step -> no re-DMA).
        return pl.BlockSpec(shape, lambda i: (0, 0))

    out = pl.pallas_call(
        iaf_made_kernel,
        out_shape=jax.ShapeDtypeStruct((Bp, Dp_out), jnp.float32),
        grid=grid,
        in_specs=[
            pl.BlockSpec((tile_b, D), lambda i: (i, 0)),   # x (unpadded features)
            const_spec((D, Hp)),                           # w1 (masked, f32)
            const_spec((1, Hp)),                           # b1
            const_spec((Hp, Hp)),                          # w2 (masked, bf16)
            const_spec((1, Hp)),                           # b2
            const_spec((Hp, Dp_out)),                      # w3 = [w3m | w3s] bf16
            const_spec((1, Dp_out)),                       # b3 = [b3m | b3s]
        ],
        out_specs=pl.BlockSpec((tile_b, Dp_out), lambda i: (i, 0)),
        compiler_params=pltpu.CompilerParams(
            dimension_semantics=("parallel",)),
    )(x_in, packed["w1"], packed["b1"], packed["w2"], packed["b2"],
      packed["w3"], packed["b3"])

    z = out[:B, :D]
    logdet = out[:B, D:2 * D]
    scale = 1.0
    return z * scale, logdet - math.log(scale)


# ------------------------- parameter / mask setup ---------------------------
def made_masks(num_input, hidden_size):
    """Standard MADE degree masks ('equal' hidden_degrees assignment)."""
    D, H = num_input, hidden_size
    in_deg = jnp.arange(1, D + 1)                                     # (D,)
    hid_deg = (jnp.arange(H) % max(1, D - 1)) + 1                     # (H,)
    out_deg = jnp.arange(1, D + 1)                                    # (D,) per chunk
    m1 = (hid_deg[None, :] >= in_deg[:, None]).astype(jnp.float32)    # (D, H)
    m2 = (hid_deg[None, :] >= hid_deg[:, None]).astype(jnp.float32)   # (H, H)
    m3 = (out_deg[None, :] > hid_deg[:, None]).astype(jnp.float32)    # (H, D)
    return m1, m2, m3


def init_params(key, num_input, hidden_size):
    """Raw (unpadded, f32) masked MADE parameters — also the reference params."""
    D, H = num_input, hidden_size
    k1, k2, k3, k4 = jax.random.split(key, 4)
    m1, m2, m3 = made_masks(D, H)
    w1 = 0.1 * jax.random.normal(k1, (D, H), jnp.float32) * m1
    w2 = 0.1 * jax.random.normal(k2, (H, H), jnp.float32) * m2
    w3m = 0.1 * jax.random.normal(k3, (H, D), jnp.float32) * m3
    w3s = 0.1 * jax.random.normal(k4, (H, D), jnp.float32) * m3
    return {
        "w1": w1, "b1": jnp.zeros((1, H), jnp.float32),
        "w2": w2, "b2": jnp.zeros((1, H), jnp.float32),
        "w3m": w3m, "b3m": jnp.zeros((1, D), jnp.float32),
        "w3s": w3s, "b3s": 0.1 * jnp.ones((1, D), jnp.float32),
    }


def pack_params(p, num_input, hidden_size):
    """Pad hidden dim to the 128-lane grain, fuse (m, s) into one 128-lane slab.

    w1 keeps its raw (D, Hp) shape in f32 (layer-1 matmul stays f32); w2/w3 are
    bf16 for the MXU.  All padding is exact zeros, so padded hidden lanes stay
    zero through the ReLUs and the padded output lanes are exact zeros.
    """
    D, H = num_input, hidden_size
    Hp = _round_up(H, 128)
    Dp_out = _round_up(2 * D, 128)      # single [m | s] output slab (128 when 2D<=128)

    w1 = jnp.zeros((D, Hp), jnp.float32).at[:, :H].set(p["w1"])
    b1 = jnp.zeros((1, Hp), jnp.float32).at[:, :H].set(p["b1"])
    w2 = jnp.zeros((Hp, Hp), jnp.float32).at[:H, :H].set(p["w2"])
    b2 = jnp.zeros((1, Hp), jnp.float32).at[:, :H].set(p["b2"])
    w3 = (jnp.zeros((Hp, Dp_out), jnp.float32)
          .at[:H, :D].set(p["w3m"])
          .at[:H, D:2 * D].set(p["w3s"]))
    b3 = (jnp.zeros((1, Dp_out), jnp.float32)
          .at[:, :D].set(p["b3m"])
          .at[:, D:2 * D].set(p["b3s"]))

    return {
        "w1": w1, "b1": b1,
        "w2": w2.astype(jnp.bfloat16), "b2": b2,
        "w3": w3.astype(jnp.bfloat16), "b3": b3,
    }


def ref_forward(x, p):
    h1 = jax.nn.relu(x @ p["w1"] + p["b1"])
    h2 = jax.nn.relu(h1 @ p["w2"] + p["b2"])
    m = h2 @ p["w3m"] + p["b3m"]
    s = h2 @ p["w3s"] + p["b3s"]
    scale = 1.0
    return (m + jnp.exp(-s) * x) * scale, s - math.log(scale)


# --------------------------------- main --------------------------------------
if __name__ == "__main__":
    key = jax.random.PRNGKey(0)
    kx, kp = jax.random.split(key)

    B, D, H = 16, 8, 32           # batch, num_input, hidden_size
    x = jax.random.normal(kx, (B, D), jnp.float32)
    raw_params = init_params(kp, D, H)
    packed_params = pack_params(raw_params, D, H)

    z, logdet = inverse_autoregressive_forward(x, packed_params)
    z, logdet = jax.block_until_ready((z, logdet))

    z_ref, logdet_ref = ref_forward(x, raw_params)
    # bf16 matmuls for layers 2/3 -> loosened tolerance vs the pure-f32 reference.
    assert jnp.allclose(z, z_ref, atol=2e-2, rtol=2e-2), \
        float(jnp.max(jnp.abs(z - z_ref)))
    assert jnp.allclose(logdet, logdet_ref, atol=2e-2, rtol=2e-2), \
        float(jnp.max(jnp.abs(logdet - logdet_ref)))

    print("KERNEL_OK")
</pallas_src>

<mosaic_0001>
module attributes {stable_mosaic.version = 11 : i64} {
  func.func @iaf_made_kernel(%arg0: i32, %arg1: memref<16x8xf32, #tpu.memory_space<vmem>>, %arg2: memref<8x128xf32, #tpu.memory_space<vmem>>, %arg3: memref<1x128xf32, #tpu.memory_space<vmem>>, %arg4: memref<128x128xbf16, #tpu.memory_space<vmem>>, %arg5: memref<1x128xf32, #tpu.memory_space<vmem>>, %arg6: memref<128x128xbf16, #tpu.memory_space<vmem>>, %arg7: memref<1x128xf32, #tpu.memory_space<vmem>>, %arg8: memref<16x128xf32, #tpu.memory_space<vmem>>) attributes {dimension_semantics = [#tpu.dimension_semantics<parallel>], iteration_bounds = array<i64: 1>, scalar_prefetch = 0 : i64, scratch_operands = 0 : i64, tpu.core_type = #tpu.core_type<tc>, window_params = [{transform_indices = @transform_0, window_bounds = array<i64: 16, 8>}, {pipeline_mode = #tpu.pipeline_mode<synchronous>, transform_indices = @transform_1, window_bounds = array<i64: 8, 128>}, {pipeline_mode = #tpu.pipeline_mode<synchronous>, transform_indices = @transform_2, window_bounds = array<i64: 1, 128>}, {pipeline_mode = #tpu.pipeline_mode<synchronous>, transform_indices = @transform_3, window_bounds = array<i64: 128, 128>}, {pipeline_mode = #tpu.pipeline_mode<synchronous>, transform_indices = @transform_4, window_bounds = array<i64: 1, 128>}, {pipeline_mode = #tpu.pipeline_mode<synchronous>, transform_indices = @transform_5, window_bounds = array<i64: 128, 128>}, {pipeline_mode = #tpu.pipeline_mode<synchronous>, transform_indices = @transform_6, window_bounds = array<i64: 1, 128>}, {transform_indices = @transform_7, window_bounds = array<i64: 16, 128>}]} {
    %c0 = arith.constant 0 : index
    %c0_0 = arith.constant 0 : index
    %0 = vector.load %arg1[%c0, %c0_0] : memref<16x8xf32, #tpu.memory_space<vmem>>, vector<16x8xf32>
    %c0_1 = arith.constant 0 : index
    %c0_2 = arith.constant 0 : index
    %1 = vector.load %arg2[%c0_1, %c0_2] : memref<8x128xf32, #tpu.memory_space<vmem>>, vector<8x128xf32>
    %cst = arith.constant dense<0.000000e+00> : vector<16x128xf32>
    %2 = tpu.matmul %0, %1, %cst {dimension_numbers = #tpu.dot_dimension_numbers<[1], [0], [0], [1], [0, 0, 1, 1], [], []>} : vector<16x8xf32>, vector<8x128xf32>, vector<16x128xf32> -> vector<16x128xf32>
    %c0_3 = arith.constant 0 : index
    %c0_4 = arith.constant 0 : index
    %3 = vector.load %arg3[%c0_3, %c0_4] : memref<1x128xf32, #tpu.memory_space<vmem>>, vector<1x128xf32>
    %4 = vector.broadcast %3 : vector<1x128xf32> to vector<16x128xf32>
    %5 = arith.addf %2, %4 : vector<16x128xf32>
    %cst_5 = arith.constant 0.000000e+00 : f32
    %6 = vector.broadcast %cst_5 : f32 to vector<16x128xf32>
    %7 = arith.maximumf %5, %6 : vector<16x128xf32>
    %8 = arith.truncf %7 : vector<16x128xf32> to vector<16x128xbf16>
    %c0_6 = arith.constant 0 : index
    %c0_7 = arith.constant 0 : index
    %9 = vector.load %arg4[%c0_6, %c0_7] : memref<128x128xbf16, #tpu.memory_space<vmem>>, vector<128x128xbf16>
    %cst_8 = arith.constant dense<0.000000e+00> : vector<16x128xf32>
    %10 = tpu.matmul %8, %9, %cst_8 {dimension_numbers = #tpu.dot_dimension_numbers<[1], [0], [0], [1], [0, 0, 1, 1], [], []>} : vector<16x128xbf16>, vector<128x128xbf16>, vector<16x128xf32> -> vector<16x128xf32>
    %c0_9 = arith.constant 0 : index
    %c0_10 = arith.constant 0 : index
    %11 = vector.load %arg5[%c0_9, %c0_10] : memref<1x128xf32, #tpu.memory_space<vmem>>, vector<1x128xf32>
    %12 = vector.broadcast %11 : vector<1x128xf32> to vector<16x128xf32>
    %13 = arith.addf %10, %12 : vector<16x128xf32>
    %cst_11 = arith.constant 0.000000e+00 : f32
    %14 = vector.broadcast %cst_11 : f32 to vector<16x128xf32>
    %15 = arith.maximumf %13, %14 : vector<16x128xf32>
    %16 = arith.truncf %15 : vector<16x128xf32> to vector<16x128xbf16>
    %c0_12 = arith.constant 0 : index
    %c0_13 = arith.constant 0 : index
    %17 = vector.load %arg6[%c0_12, %c0_13] : memref<128x128xbf16, #tpu.memory_space<vmem>>, vector<128x128xbf16>
    %cst_14 = arith.constant dense<0.000000e+00> : vector<16x128xf32>
    %18 = tpu.matmul %16, %17, %cst_14 {dimension_numbers = #tpu.dot_dimension_numbers<[1], [0], [0], [1], [0, 0, 1, 1], [], []>} : vector<16x128xbf16>, vector<128x128xbf16>, vector<16x128xf32> -> vector<16x128xf32>
    %c0_15 = arith.constant 0 : index
    %c0_16 = arith.constant 0 : index
    %19 = vector.load %arg7[%c0_15, %c0_16] : memref<1x128xf32, #tpu.memory_space<vmem>>, vector<1x128xf32>
    %20 = vector.broadcast %19 : vector<1x128xf32> to vector<16x128xf32>
    %21 = arith.addf %18, %20 : vector<16x128xf32>
    %c120_i32 = arith.constant 120 : i32
    %22 = tpu.dynamic_rotate %21 by %c120_i32 dim 1 : vector<16x128xf32>, i32 -> vector<16x128xf32>
    %23 = vector.extract_strided_slice %21 {offsets = [0, 0], sizes = [16, 8], strides = [1, 1]} : vector<16x128xf32> to vector<16x8xf32>
    %24 = vector.extract_strided_slice %22 {offsets = [0, 0], sizes = [16, 8], strides = [1, 1]} : vector<16x128xf32> to vector<16x8xf32>
    %cst_17 = arith.constant 0.000000e+00 : f32
    %25 = vector.broadcast %cst_17 : f32 to vector<16x8xf32>
    %26 = arith.subf %25, %24 : vector<16x8xf32>
    %27 = math.exp %26 : vector<16x8xf32>
    %28 = arith.mulf %27, %0 : vector<16x8xf32>
    %29 = arith.addf %23, %28 : vector<16x8xf32>
    %c0_18 = arith.constant 0 : index
    %c0_19 = arith.constant 0 : index
    %30 = vector.load %arg8[%c0_18, %c0_19] : memref<16x128xf32, #tpu.memory_space<vmem>>, vector<16x128xf32>
    tpu.vector_store %arg8[%c0_18, %c0_19], %21 {strides = array<i32>} : memref<16x128xf32, #tpu.memory_space<vmem>>, vector<16x128xf32>,
    %c0_20 = arith.constant 0 : index
    %c0_21 = arith.constant 0 : index
    %31 = vector.load %arg8[%c0_20, %c0_21] : memref<16x128xf32, #tpu.memory_space<vmem>>, vector<16x8xf32>
    tpu.vector_store %arg8[%c0_20, %c0_21], %29 {strides = array<i32>} : memref<16x128xf32, #tpu.memory_space<vmem>>, vector<16x8xf32>,
    return
  }
  func.func @transform_0(%arg0: i32) -> (i32, i32) {
    %c0_i32 = arith.constant 0 : i32
    %c0_i32_0 = arith.constant 0 : i32
    return %arg0, %c0_i32 : i32, i32
  }
  func.func @transform_1(%arg0: i32) -> (i32, i32) {
    %c0_i32 = arith.constant 0 : i32
    %c0_i32_0 = arith.constant 0 : i32
    %c0_i32_1 = arith.constant 0 : i32
    return %c0_i32, %c0_i32_0 : i32, i32
  }
  func.func @transform_2(%arg0: i32) -> (i32, i32) {
    %c0_i32 = arith.constant 0 : i32
    %c0_i32_0 = arith.constant 0 : i32
    %c0_i32_1 = arith.constant 0 : i32
    return %c0_i32, %c0_i32_0 : i32, i32
  }
  func.func @transform_3(%arg0: i32) -> (i32, i32) {
    %c0_i32 = arith.constant 0 : i32
    %c0_i32_0 = arith.constant 0 : i32
    %c0_i32_1 = arith.constant 0 : i32
    return %c0_i32, %c0_i32_0 : i32, i32
  }
  func.func @transform_4(%arg0: i32) -> (i32, i32) {
    %c0_i32 = arith.constant 0 : i32
    %c0_i32_0 = arith.constant 0 : i32
    %c0_i32_1 = arith.constant 0 : i32
    return %c0_i32, %c0_i32_0 : i32, i32
  }
  func.func @transform_5(%arg0: i32) -> (i32, i32) {
    %c0_i32 = arith.constant 0 : i32
    %c0_i32_0 = arith.constant 0 : i32
    %c0_i32_1 = arith.constant 0 : i32
    return %c0_i32, %c0_i32_0 : i32, i32
  }
  func.func @transform_6(%arg0: i32) -> (i32, i32) {
    %c0_i32 = arith.constant 0 : i32
    %c0_i32_0 = arith.constant 0 : i32
    %c0_i32_1 = arith.constant 0 : i32
    return %c0_i32, %c0_i32_0 : i32, i32
  }
  func.func @transform_7(%arg0: i32) -> (i32, i32) {
    %c0_i32 = arith.constant 0 : i32
    %c0_i32_0 = arith.constant 0 : i32
    return %arg0, %c0_i32 : i32, i32
  }
}

</mosaic_0001>

<llo_original>
// kernel: tpu_custom_call.1
$region0: #{tpu_custom_call.1}
  #allocation0 [shape = 'u32[]', space=smem, size = 0x4, offset = 0x4, fixed_abs, tag = 'smem constant byte address 0x4 - core index']
  #allocation1 [shape = 'u32[72,128]{1,0:T(1,128)}', space=vmem, size = 0x9000, scoped, tag = 'internal scratch']
  %s0 = inlined_call_operand.vmem [shape: f32[16,8], index: 0, kind: input, shape index: {}]
  %s1 = inlined_call_operand.vmem [shape: f32[8,128], index: 1, kind: input, shape index: {}]
  %s2 = inlined_call_operand.vmem [shape: f32[1,128], index: 2, kind: input, shape index: {}]
  %s3 = inlined_call_operand.hbm [shape: bf16[128,128], index: 3, kind: input, shape index: {}]
  %s4 = inlined_call_operand.vmem [shape: f32[1,128], index: 4, kind: input, shape index: {}]
  %s5 = inlined_call_operand.hbm [shape: bf16[128,128], index: 5, kind: input, shape index: {}]
  %s6 = inlined_call_operand.vmem [shape: f32[1,128], index: 6, kind: input, shape index: {}]
  %s7 = inlined_call_operand.hbm [shape: f32[16,128], index: 7, kind: output, shape index: {}]
  %s8 = sld [smem:[#allocation0]]
  $region46: #{tpu_custom_call.1} parent=0
    _
  %s10 = ssub.s32 1, %s8
  %s11 = scalar_select 0, %s10, %s8
  $region1: #{tpu_custom_call.1} parent=0
    #allocation2 [shape = 'u8[32768]{0}', space=vmem, size = 0x8000, scoped, tag = 'input window, operand 3, single buffered']
    #allocation3 [shape = 's32[1]{0}', space=sflag, size = 0x4, scoped, tag = 'scoped memory for tpu_custom_call.1']
    #allocation4 [shape = 's32[1]{0}', space=sflag, size = 0x4, scoped, tag = 'scoped memory for tpu_custom_call.1']
    #allocation5 [shape = 'u8[32768]{0}', space=vmem, size = 0x8000, scoped, tag = 'input window, operand 5, single buffered']
    #allocation6 [shape = 's32[1]{0}', space=sflag, size = 0x4, scoped, tag = 'scoped memory for tpu_custom_call.1']
    #allocation7 [shape = 'u8[8192]{0}', space=vmem, size = 0x2000, scoped, tag = 'output window, operand 0, single buffered']
    %12 = vsyncpa [#allocation3], 0
    %13 = vsyncpa [#allocation6], 0
    %14 = vsyncpa [#allocation4], 0
    // Predicated region
    $region2: #{tpu_custom_call.1} parent=1 // pred_check
      _
    $region3: #{tpu_custom_call.1} parent=1 // pred_check_branch
      %16 = sbr.rel (0) target = $region5
    $region4: #{tpu_custom_call.1} parent=1 // pred_region
      _
    $region5: #{tpu_custom_call.1} parent=1 // pred_fallthru
      _
    // Predicated region
    $region6: #{tpu_custom_call.1} parent=1 // pred_check
      _
    $region7: #{tpu_custom_call.1} parent=1 // pred_check_branch
      %18 = sbr.rel (0) target = $region9
    $region8: #{tpu_custom_call.1} parent=1 // pred_region
      _
    $region9: #{tpu_custom_call.1} parent=1 // pred_fallthru
      _
    // Predicated region
    $region10: #{tpu_custom_call.1} parent=1 // pred_check
      _
    $region11: #{tpu_custom_call.1} parent=1 // pred_check_branch
      %20 = sbr.rel (0) target = $region13
    $region12: #{tpu_custom_call.1} parent=1 // pred_region
      _
    $region13: #{tpu_custom_call.1} parent=1 // pred_fallthru
      _
    // Predicated region
    $region14: #{tpu_custom_call.1} parent=1 // pred_check
      _
    $region15: #{tpu_custom_call.1} parent=1 // pred_check_branch
      %22 = sbr.rel (0) target = $region17
    $region16: #{tpu_custom_call.1} parent=1 // pred_region
      %24 = vsyncadd [#allocation3], 0
      %s25 = sshll.u32 %s3, 4
      %s26 = int_to_ptr.hbm [resolvable:$true] %s25
      %s27 = sshll.u32 [#allocation2], 4
      %s28 = int_to_ptr.vmem [resolvable:$true] %s27
      %33 = dma.hbm_to_vmem [thread:$0]  %s26, 1024, %s28, [#allocation3], 64, 64, 4
    $region17: #{tpu_custom_call.1} parent=1 // pred_fallthru
      _
    // Predicated region
    $region18: #{tpu_custom_call.1} parent=1 // pred_check
      _
    $region19: #{tpu_custom_call.1} parent=1 // pred_check_branch
      %35 = sbr.rel (0) target = $region21
    $region20: #{tpu_custom_call.1} parent=1 // pred_region
      _
    $region21: #{tpu_custom_call.1} parent=1 // pred_fallthru
      _
    // Predicated region
    $region22: #{tpu_custom_call.1} parent=1 // pred_check
      _
    $region23: #{tpu_custom_call.1} parent=1 // pred_check_branch
      %37 = sbr.rel (0) target = $region25
    $region24: #{tpu_custom_call.1} parent=1 // pred_region
      %39 = vsyncadd [#allocation6], 0
      %s40 = sshll.u32 %s5, 4
      %s41 = int_to_ptr.hbm [resolvable:$true] %s40
      %s42 = sshll.u32 [#allocation5], 4
      %s43 = int_to_ptr.vmem [resolvable:$true] %s42
      %48 = dma.hbm_to_vmem [thread:$0]  %s41, 1024, %s43, [#allocation6], 64, 64, 4
    $region25: #{tpu_custom_call.1} parent=1 // pred_fallthru
      _
    // Predicated region
    $region26: #{tpu_custom_call.1} parent=1 // pred_check
      _
    $region27: #{tpu_custom_call.1} parent=1 // pred_check_branch
      %50 = sbr.rel (0) target = $region29
    $region28: #{tpu_custom_call.1} parent=1 // pred_region
      _
    $region29: #{tpu_custom_call.1} parent=1 // pred_fallthru
      _
    // Predicated region
    $region30: #{tpu_custom_call.1} parent=1 // pred_check
      _
    $region31: #{tpu_custom_call.1} parent=1 // pred_check_branch
      %52 = sbr.rel (0) target = $region33
    $region32: #{tpu_custom_call.1} parent=1 // pred_region
      %54 = dma.done [#allocation3], 1024
    $region33: #{tpu_custom_call.1} parent=1 // pred_fallthru
      _
    // Predicated region
    $region34: #{tpu_custom_call.1} parent=1 // pred_check
      _
    $region35: #{tpu_custom_call.1} parent=1 // pred_check_branch
      %56 = sbr.rel (0) target = $region37
    $region36: #{tpu_custom_call.1} parent=1 // pred_region
      %58 = dma.done [#allocation6], 1024
    $region37: #{tpu_custom_call.1} parent=1 // pred_fallthru
      _
    %v59 = vld [vmem:[%s0] sm:$0xff]
    %v60 = vld [vmem:[%s0 + $0x8] sm:$0xff]
    %v61 = vld [vmem:[%s1] sm:$0xff]
    %v62 = vld [vmem:[%s2] sm:$0x1]
    %v64 = vperm.slane %v62, 0
    %vm66 = vcmask 64512
    %v68 = vsel %vm66, %v59, 0
    %v71 = vsel %vm66, %v60, 0
    %73 = vmatpush.msra.mxu0 0.0
    %74 = vmatpush.msra.mxu0 0.0
    %75 = vmatpush.msra.mxu0 0.0
    %76 = vmatpush.msra.mxu0 0.0
    %77 = vmatpush.msra.mxu0 0.0
    %78 = vmatpush.msra.mxu0 0.0
    %79 = vmatpush.msra.mxu0 0.0
    %80 = vmatpush.msra.mxu0 0.0
    %81 = vmatpush.msra.mxu0 0.0
    %82 = vmatpush.msra.mxu0 0.0
    %83 = vmatpush.msra.mxu0 0.0
    %84 = vmatpush.msra.mxu0 0.0
    %85 = vmatpush.msra.mxu0 0.0
    %86 = vmatpush.msra.mxu0 0.0
    %87 = vmatpush.msra.mxu0 0.0
    %88 = vmatpush.msra.mxu0 %v61
    %89 = vmatmul.f32.gmra.mxu0 %v68
    %v90 = vpop.f32.mrf.mxu0
    %v91 = vadd.f32 %v64, %v90
    %92 = vmatmul.f32.gmra.mxu0 %v71
    %v93 = vpop.f32.mrf.mxu0
    %v94 = vadd.f32 %v64, %v93
    %95 = vdwg.mxu0
    %v96 = vmax.f32 %v91, 0.0
    %v97 = vmax.f32 %v94, 0.0
    %v98 = vpack.c.bf16 %v97, %v96
    %v99 = vld [vmem:[#allocation2] sm:$0xf]
    %v100 = vld [vmem:[#allocation2 + $0x4] sm:$0xf]
    %v101 = vld [vmem:[#allocation2 + $0x8] sm:$0xf]
    %v102 = vld [vmem:[#allocation2 + $0xc] sm:$0xf]
    %v103 = vld [vmem:[#allocation2 + $0x10] sm:$0xf]
    %v104 = vld [vmem:[#allocation2 + $0x14] sm:$0xf]
    %v105 = vld [vmem:[#allocation2 + $0x18] sm:$0xf]
    %v106 = vld [vmem:[#allocation2 + $0x1c] sm:$0xf]
    %v107 = vld [vmem:[#allocation2 + $0x20] sm:$0xf]
    %v108 = vld [vmem:[#allocation2 + $0x24] sm:$0xf]
    %v109 = vld [vmem:[#allocation2 + $0x28] sm:$0xf]
    %v110 = vld [vmem:[#allocation2 + $0x2c] sm:$0xf]
    %v111 = vld [vmem:[#allocation2 + $0x30] sm:$0xf]
    %v112 = vld [vmem:[#allocation2 + $0x34] sm:$0xf]
    %v113 = vld [vmem:[#allocation2 + $0x38] sm:$0xf]
    %v114 = vld [vmem:[#allocation2 + $0x3c] sm:$0xf]
    %v115 = vld [vmem:[%s4] sm:$0x1]
    %v117 = vperm.slane %v115, 0
    %v135 = vunpack.c.l.b16 %v99
    %v136 = vunpack.c.l.b16 %v100
    %v137 = vunpack.c.l.b16 %v101
    %v138 = vunpack.c.l.b16 %v102
    %v139 = vunpack.c.l.b16 %v103
    %v140 = vunpack.c.l.b16 %v104
    %v141 = vunpack.c.l.b16 %v105
    %v142 = vunpack.c.l.b16 %v106
    %v143 = vunpack.c.l.b16 %v107
    %v144 = vunpack.c.l.b16 %v108
    %v145 = vunpack.c.l.b16 %v109
    %v146 = vunpack.c.l.b16 %v110
    %v147 = vunpack.c.l.b16 %v111
    %v148 = vunpack.c.l.b16 %v112
    %v149 = vunpack.c.l.b16 %v113
    %v150 = vunpack.c.l.b16 %v114
    %v151 = vpack.c.b16 %v136, %v135
    %v152 = vpack.c.b16 %v138, %v137
    %v153 = vpack.c.b16 %v140, %v139
    %v154 = vpack.c.b16 %v142, %v141
    %v155 = vpack.c.b16 %v144, %v143
    %v156 = vpack.c.b16 %v146, %v145
    %v157 = vpack.c.b16 %v148, %v147
    %v158 = vpack.c.b16 %v150, %v149
    %167 = vmatpush.bf16.msra.mxu0 %v158
    %168 = vmatpush.bf16.msra.mxu0 %v157
    %169 = vmatpush.bf16.msra.mxu0 %v156
    %170 = vmatpush.bf16.msra.mxu0 %v155
    %171 = vmatpush.bf16.msra.mxu0 %v154
    %172 = vmatpush.bf16.msra.mxu0 %v153
    %173 = vmatpush.bf16.msra.mxu0 %v152
    %174 = vmatpush.bf16.msra.mxu0 %v151
    %175 = vmatmul.bf16.gmra.mxu0 %v98
    %v176 = vpop.f32.mrf.mxu0
    %v177 = vadd.f32 %v117, %v176
    %v178 = vpop.f32.mrf.mxu0
    %v179 = vadd.f32 %v117, %v178
    %180 = vdwg.mxu0
    %v181 = vmax.f32 %v177, 0.0
    %v182 = vmax.f32 %v179, 0.0
    %v183 = vpack.c.bf16 %v182, %v181
    %v184 = vld [vmem:[#allocation5] sm:$0xf]
    %v185 = vld [vmem:[#allocation5 + $0x4] sm:$0xf]
    %v186 = vld [vmem:[#allocation5 + $0x8] sm:$0xf]
    %v187 = vld [vmem:[#allocation5 + $0xc] sm:$0xf]
    %v188 = vld [vmem:[#allocation5 + $0x10] sm:$0xf]
    %v189 = vld [vmem:[#allocation5 + $0x14] sm:$0xf]
    %v190 = vld [vmem:[#allocation5 + $0x18] sm:$0xf]
    %v191 = vld [vmem:[#allocation5 + $0x1c] sm:$0xf]
    %v192 = vld [vmem:[#allocation5 + $0x20] sm:$0xf]
    %v193 = vld [vmem:[#allocation5 + $0x24] sm:$0xf]
    %v194 = vld [vmem:[#allocation5 + $0x28] sm:$0xf]
    %v195 = vld [vmem:[#allocation5 + $0x2c] sm:$0xf]
    %v196 = vld [vmem:[#allocation5 + $0x30] sm:$0xf]
    %v197 = vld [vmem:[#allocation5 + $0x34] sm:$0xf]
    %v198 = vld [vmem:[#allocation5 + $0x38] sm:$0xf]
    %v199 = vld [vmem:[#allocation5 + $0x3c] sm:$0xf]
    %v200 = vld [vmem:[%s6] sm:$0x1]
    %v202 = vperm.slane %v200, 0
    %v220 = vunpack.c.l.b16 %v184
    %v221 = vunpack.c.l.b16 %v185
    %v222 = vunpack.c.l.b16 %v186
    %v223 = vunpack.c.l.b16 %v187
    %v224 = vunpack.c.l.b16 %v188
    %v225 = vunpack.c.l.b16 %v189
    %v226 = vunpack.c.l.b16 %v190
    %v227 = vunpack.c.l.b16 %v191
    %v228 = vunpack.c.l.b16 %v192
    %v229 = vunpack.c.l.b16 %v193
    %v230 = vunpack.c.l.b16 %v194
    %v231 = vunpack.c.l.b16 %v195
    %v232 = vunpack.c.l.b16 %v196
    %v233 = vunpack.c.l.b16 %v197
    %v234 = vunpack.c.l.b16 %v198
    %v235 = vunpack.c.l.b16 %v199
    %v236 = vpack.c.b16 %v221, %v220
    %v237 = vpack.c.b16 %v223, %v222
    %v238 = vpack.c.b16 %v225, %v224
    %v239 = vpack.c.b16 %v227, %v226
    %v240 = vpack.c.b16 %v229, %v228
    %v241 = vpack.c.b16 %v231, %v230
    %v242 = vpack.c.b16 %v233, %v232
    %v243 = vpack.c.b16 %v235, %v234
    %252 = vmatpush.bf16.msra.mxu0 %v243
    %253 = vmatpush.bf16.msra.mxu0 %v242
    %254 = vmatpush.bf16.msra.mxu0 %v241
    %255 = vmatpush.bf16.msra.mxu0 %v240
    %256 = vmatpush.bf16.msra.mxu0 %v239
    %257 = vmatpush.bf16.msra.mxu0 %v238
    %258 = vmatpush.bf16.msra.mxu0 %v237
    %259 = vmatpush.bf16.msra.mxu0 %v236
    %260 = vmatmul.bf16.gmra.mxu0 %v183
    %v261 = vpop.f32.mrf.mxu0
    %v262 = vadd.f32 %v202, %v261
    %v263 = vpop.f32.mrf.mxu0
    %v264 = vadd.f32 %v202, %v263
    %265 = vdwg.mxu0
    %266 = vrot.lane.b32.xlu0 %v262, 120
    %v267 = vpop.permute.xlu0 %266
    %268 = vrot.lane.b32.xlu0 %v264, 120
    %v269 = vpop.permute.xlu0 %268
    %v270 = vsub.f32 0.0, %v267
    %v271 = vsub.f32 0.0, %v269
    %v272 = vmul.f32 %v270, 1.442695
    %v273 = vpow.pop %v272
    %v274 = vmul.f32 %v271, 1.442695
    %v275 = vpow.pop %v274
    %v276 = vmul.f32 %v273, %v59
    %v277 = vmul.f32 %v275, %v60
    %v278 = vadd.f32 %v262, %v276
    %v279 = vadd.f32 %v264, %v277
    %280 = vst [vmem:[#allocation7] sm:$0xff] %v262
    %281 = vst [vmem:[#allocation7 + $0x8] sm:$0xff] %v264
    %282 = vst.msk [vmem:[#allocation7] sm:$0xff] %vm66, %v278
    %283 = vst.msk [vmem:[#allocation7 + $0x8] sm:$0xff] %vm66, %v279
    // Predicated region
    $region38: #{tpu_custom_call.1} parent=1 // pred_check
      _
    $region39: #{tpu_custom_call.1} parent=1 // pred_check_branch
      %285 = sbr.rel (0) target = $region41
    $region40: #{tpu_custom_call.1} parent=1 // pred_region
      %287 = vsyncadd [#allocation4], 0
      %s288 = sshll.u32 [#allocation7], 4
      %s289 = int_to_ptr.vmem [resolvable:$true] %s288
      %s290 = sshll.u32 %s7, 4
      %s291 = int_to_ptr.hbm [resolvable:$true] %s290
      %296 = dma.vmem_to_hbm [thread:$0]  %s289, 256, %s291, [#allocation4], 128, 128, 8
    $region41: #{tpu_custom_call.1} parent=1 // pred_fallthru
      _
    // Predicated region
    $region42: #{tpu_custom_call.1} parent=1 // pred_check
      _
    $region43: #{tpu_custom_call.1} parent=1 // pred_check_branch
      %298 = sbr.rel (0) target = $region45
    $region44: #{tpu_custom_call.1} parent=1 // pred_region
      %300 = dma.done [#allocation4], 256
    $region45: #{tpu_custom_call.1} parent=1 // pred_fallthru
      _
    %301 = vsyncpa [#allocation3], 1
    %302 = vsyncpa [#allocation6], 1
    %303 = vsyncpa [#allocation4], 1

</llo_original>
